<compile_context>
chip_gen: v5e
topology: v5e:2x2
jax: 0.10.0
libtpu: 0.0.40
codegen_flags: <defaults>
</compile_context>

<pallas_src>
import functools

import numpy as np
import jax
import jax.numpy as jnp
from jax import lax
from jax.experimental import pallas as pl
from jax.experimental.pallas import tpu as pltpu


# MXU operand dtype: bf16 hits native MXU rate on v5e/v6e/v7x and halves
# operand bytes; accumulation stays f32 via preferred_element_type.
MXU_DTYPE = jnp.bfloat16


# ----------------------------------------------------------------------------
# Fused network kernel (single gridless invocation; everything VMEM-resident).
#   x_ref    : (cin, N*H*W)  f32  lane-dense input slab (flat p = n*HW+h*W+w)
#   mask_ref : (9, N*H*W)    f32  precomputed per-tap SAME-padding masks
#   w1_ref   : (c1, 9*cin)   bf16 (kh, kw, ci) row-major flatten
#   b1_ref   : (c1, 1)       f32
#   w2_ref   : (c2, 9*c1)    bf16
#   b2_ref   : (c2, 1)       f32
#   wfc_ref  : (c2, ncls)    f32
#   bfc_ref  : (1, ncls)     f32
#   o_ref    : (N, ncls)     f32  logits already in module layout (no .T later)
# ----------------------------------------------------------------------------
def _net_kernel(x_ref, mask_ref, w1_ref, b1_ref, w2_ref, b2_ref,
                wfc_ref, bfc_ref, o_ref, *, N, H, W):
    HW = H * W
    NHW = N * HW
    mask = mask_ref[...]                                    # (9, NHW) f32

    def conv3x3_relu(x_slab, w, b):
        # Build the im2col operand as a register value: one lane roll (XLU)
        # and one mask multiply per tap; each tap is cast to bf16 so the
        # concatenated (9*cin_l, NHW) operand feeds a single MXU dot.
        taps = []
        for tap in range(9):
            dh = tap // 3 - 1
            dw = tap % 3 - 1
            off = dh * W + dw
            shifted = x_slab if off == 0 else pltpu.roll(
                x_slab, shift=(-off) % NHW, axis=1)
            taps.append((shifted * mask[tap:tap + 1, :]).astype(MXU_DTYPE))
        rhs = jnp.concatenate(taps, axis=0)                 # (9*cin_l, NHW)
        acc = jnp.dot(w, rhs, preferred_element_type=jnp.float32)
        return jnp.maximum(acc + b, 0.0)                    # (cout, NHW) f32

    a1 = conv3x3_relu(x_ref[...], w1_ref[...], b1_ref[...])    # (c1, NHW)
    a2 = conv3x3_relu(a1, w2_ref[...], b2_ref[...])            # (c2, NHW)

    # Global average pool: per-image lane-axis reduce (XLU).  No pool matmul,
    # no (NHW, N) iotas or integer divides.
    cols = [a2[:, n * HW:(n + 1) * HW].sum(axis=-1, keepdims=True)
            for n in range(N)]
    pooled = jnp.concatenate(cols, axis=1) * (1.0 / HW)     # (c2, N) f32

    # Classifier head: transposed-LHS dot so logits land directly as
    # (N, ncls) — no in-kernel or wrapper-level output transpose.
    logits = lax.dot_general(pooled, wfc_ref[...],
                             dimension_numbers=(((0,), (0,)), ((), ())),
                             preferred_element_type=jnp.float32)  # (N, ncls)
    o_ref[...] = (logits + bfc_ref[...]).astype(o_ref.dtype)


# ----------------------------------------------------------------------------
# One-time layout glue (hoisted out of the per-call path per review).
# ----------------------------------------------------------------------------
def prepare_net(params, input_shape):
    N, cin, H, W = input_shape
    NHW = N * H * W
    c1 = params["w1"].shape[-1]
    c2 = params["w2"].shape[-1]
    ncls = params["w_fc"].shape[-1]

    # Per-tap validity masks: implement SAME padding and also kill any
    # cross-image / wraparound leakage from the circular lane roll.
    p = np.arange(NHW)
    hh = (p // W) % H
    ww = p % W
    mask = np.empty((9, NHW), np.float32)
    for tap in range(9):
        dh, dw = tap // 3 - 1, tap % 3 - 1
        mask[tap] = ((hh + dh >= 0) & (hh + dh < H) &
                     (ww + dw >= 0) & (ww + dw < W)).astype(np.float32)

    return {
        "mask": jnp.asarray(mask),
        "w1": jnp.transpose(params["w1"], (3, 0, 1, 2))
                 .reshape(c1, 9 * cin).astype(MXU_DTYPE),
        "b1": params["b1"].reshape(c1, 1).astype(jnp.float32),
        "w2": jnp.transpose(params["w2"], (3, 0, 1, 2))
                 .reshape(c2, 9 * c1).astype(MXU_DTYPE),
        "b2": params["b2"].reshape(c2, 1).astype(jnp.float32),
        "w_fc": params["w_fc"].astype(jnp.float32),          # (c2, ncls)
        "b_fc": params["b_fc"].reshape(1, ncls).astype(jnp.float32),
    }


# ----------------------------------------------------------------------------
# Wrapper: PyTorch-style NCHW input -> logits (N, num_classes).
# ----------------------------------------------------------------------------
@jax.jit
def net_forward(x_nchw, prep):
    N, cin, H, W = x_nchw.shape
    ncls = prep["w_fc"].shape[-1]
    NHW = N * H * W

    # Channels on sublanes, flattened batch*spatial on the 128-wide lane axis.
    x_flat = jnp.transpose(x_nchw, (1, 0, 2, 3)).reshape(cin, NHW)
    x_flat = x_flat.astype(jnp.float32)

    kernel = functools.partial(_net_kernel, N=N, H=H, W=W)
    return pl.pallas_call(
        kernel,
        out_shape=jax.ShapeDtypeStruct((N, ncls), jnp.float32),
    )(x_flat, prep["mask"], prep["w1"], prep["b1"],
      prep["w2"], prep["b2"], prep["w_fc"], prep["b_fc"])


def init_params(key, cin=1, c1=8, c2=16, num_classes=10):
    k1, k2, k3, k4, k5, k6 = jax.random.split(key, 6)
    scale = 0.1
    return {
        "w1": scale * jax.random.normal(k1, (3, 3, cin, c1), jnp.float32),
        "b1": scale * jax.random.normal(k2, (c1,), jnp.float32),
        "w2": scale * jax.random.normal(k3, (3, 3, c1, c2), jnp.float32),
        "b2": scale * jax.random.normal(k4, (c2,), jnp.float32),
        "w_fc": scale * jax.random.normal(k5, (c2, num_classes), jnp.float32),
        "b_fc": scale * jax.random.normal(k6, (num_classes,), jnp.float32),
    }


# Plain-JAX reference for correctness checking of the Pallas kernel.
def net_forward_ref(x_nchw, params):
    x = jnp.transpose(x_nchw, (0, 2, 3, 1))  # NHWC

    def conv(x, w, b):
        y = lax.conv_general_dilated(
            x, w, window_strides=(1, 1), padding="SAME",
            dimension_numbers=("NHWC", "HWIO", "NHWC"))
        return jnp.maximum(y + b[None, None, None, :], 0.0)

    x = conv(x, params["w1"], params["b1"])
    x = conv(x, params["w2"], params["b2"])
    pooled = jnp.mean(x, axis=(1, 2))
    return pooled @ params["w_fc"] + params["b_fc"][None, :]


if __name__ == "__main__":
    key = jax.random.PRNGKey(0)
    kx, kp = jax.random.split(key)

    # in_chans=1 per the module; small shapes: batch=2, 16x16 spatial.
    x = jax.random.normal(kx, (2, 1, 16, 16), jnp.float32)  # NCHW
    params = init_params(kp)
    prep = prepare_net(params, x.shape)      # one-time; outside the call path

    out = jax.block_until_ready(net_forward(x, prep))

    ref = net_forward_ref(x, params)
    assert out.shape == (2, 10)
    # bf16 MXU operands -> looser tolerance than the all-f32 version.
    assert jnp.allclose(out, ref, atol=2e-2, rtol=2e-2)

    print("KERNEL_OK")
</pallas_src>

<mosaic_0001>
module attributes {stable_mosaic.version = 11 : i64} {
  func.func @_net_kernel(%arg0: memref<1x512xf32, #tpu.memory_space<vmem>>, %arg1: memref<9x512xf32, #tpu.memory_space<vmem>>, %arg2: memref<8x9xbf16, #tpu.memory_space<vmem>>, %arg3: memref<8x1xf32, #tpu.memory_space<vmem>>, %arg4: memref<16x72xbf16, #tpu.memory_space<vmem>>, %arg5: memref<16x1xf32, #tpu.memory_space<vmem>>, %arg6: memref<16x10xf32, #tpu.memory_space<vmem>>, %arg7: memref<1x10xf32, #tpu.memory_space<vmem>>, %arg8: memref<2x10xf32, #tpu.memory_space<vmem>>) attributes {dimension_semantics = [], scalar_prefetch = 0 : i64, scratch_operands = 0 : i64, tpu.core_type = #tpu.core_type<tc>} {
    %c0 = arith.constant 0 : index
    %c0_0 = arith.constant 0 : index
    %0 = vector.load %arg1[%c0, %c0_0] : memref<9x512xf32, #tpu.memory_space<vmem>>, vector<9x512xf32>
    %c0_1 = arith.constant 0 : index
    %c0_2 = arith.constant 0 : index
    %1 = vector.load %arg0[%c0_1, %c0_2] : memref<1x512xf32, #tpu.memory_space<vmem>>, vector<1x512xf32>
    %c0_3 = arith.constant 0 : index
    %c0_4 = arith.constant 0 : index
    %2 = vector.load %arg2[%c0_3, %c0_4] : memref<8x9xbf16, #tpu.memory_space<vmem>>, vector<8x9xbf16>
    %c0_5 = arith.constant 0 : index
    %c0_6 = arith.constant 0 : index
    %3 = vector.load %arg3[%c0_5, %c0_6] : memref<8x1xf32, #tpu.memory_space<vmem>>, vector<8x1xf32>
    %c17_i32 = arith.constant 17 : i32
    %4 = tpu.dynamic_rotate %1 by %c17_i32 dim 1 : vector<1x512xf32>, i32 -> vector<1x512xf32>
    %5 = vector.extract_strided_slice %0 {offsets = [0, 0], sizes = [1, 512], strides = [1, 1]} : vector<9x512xf32> to vector<1x512xf32>
    %6 = arith.mulf %4, %5 : vector<1x512xf32>
    %7 = arith.truncf %6 : vector<1x512xf32> to vector<1x512xbf16>
    %c16_i32 = arith.constant 16 : i32
    %8 = tpu.dynamic_rotate %1 by %c16_i32 dim 1 : vector<1x512xf32>, i32 -> vector<1x512xf32>
    %9 = vector.extract_strided_slice %0 {offsets = [1, 0], sizes = [1, 512], strides = [1, 1]} : vector<9x512xf32> to vector<1x512xf32>
    %10 = arith.mulf %8, %9 : vector<1x512xf32>
    %11 = arith.truncf %10 : vector<1x512xf32> to vector<1x512xbf16>
    %c15_i32 = arith.constant 15 : i32
    %12 = tpu.dynamic_rotate %1 by %c15_i32 dim 1 : vector<1x512xf32>, i32 -> vector<1x512xf32>
    %13 = vector.extract_strided_slice %0 {offsets = [2, 0], sizes = [1, 512], strides = [1, 1]} : vector<9x512xf32> to vector<1x512xf32>
    %14 = arith.mulf %12, %13 : vector<1x512xf32>
    %15 = arith.truncf %14 : vector<1x512xf32> to vector<1x512xbf16>
    %c1_i32 = arith.constant 1 : i32
    %16 = tpu.dynamic_rotate %1 by %c1_i32 dim 1 : vector<1x512xf32>, i32 -> vector<1x512xf32>
    %17 = vector.extract_strided_slice %0 {offsets = [3, 0], sizes = [1, 512], strides = [1, 1]} : vector<9x512xf32> to vector<1x512xf32>
    %18 = arith.mulf %16, %17 : vector<1x512xf32>
    %19 = arith.truncf %18 : vector<1x512xf32> to vector<1x512xbf16>
    %20 = vector.extract_strided_slice %0 {offsets = [4, 0], sizes = [1, 512], strides = [1, 1]} : vector<9x512xf32> to vector<1x512xf32>
    %21 = arith.mulf %1, %20 : vector<1x512xf32>
    %22 = arith.truncf %21 : vector<1x512xf32> to vector<1x512xbf16>
    %c511_i32 = arith.constant 511 : i32
    %23 = tpu.dynamic_rotate %1 by %c511_i32 dim 1 : vector<1x512xf32>, i32 -> vector<1x512xf32>
    %24 = vector.extract_strided_slice %0 {offsets = [5, 0], sizes = [1, 512], strides = [1, 1]} : vector<9x512xf32> to vector<1x512xf32>
    %25 = arith.mulf %23, %24 : vector<1x512xf32>
    %26 = arith.truncf %25 : vector<1x512xf32> to vector<1x512xbf16>
    %c497_i32 = arith.constant 497 : i32
    %27 = tpu.dynamic_rotate %1 by %c497_i32 dim 1 : vector<1x512xf32>, i32 -> vector<1x512xf32>
    %28 = vector.extract_strided_slice %0 {offsets = [6, 0], sizes = [1, 512], strides = [1, 1]} : vector<9x512xf32> to vector<1x512xf32>
    %29 = arith.mulf %27, %28 : vector<1x512xf32>
    %30 = arith.truncf %29 : vector<1x512xf32> to vector<1x512xbf16>
    %c496_i32 = arith.constant 496 : i32
    %31 = tpu.dynamic_rotate %1 by %c496_i32 dim 1 : vector<1x512xf32>, i32 -> vector<1x512xf32>
    %32 = vector.extract_strided_slice %0 {offsets = [7, 0], sizes = [1, 512], strides = [1, 1]} : vector<9x512xf32> to vector<1x512xf32>
    %33 = arith.mulf %31, %32 : vector<1x512xf32>
    %34 = arith.truncf %33 : vector<1x512xf32> to vector<1x512xbf16>
    %c495_i32 = arith.constant 495 : i32
    %35 = tpu.dynamic_rotate %1 by %c495_i32 dim 1 : vector<1x512xf32>, i32 -> vector<1x512xf32>
    %36 = vector.extract_strided_slice %0 {offsets = [8, 0], sizes = [1, 512], strides = [1, 1]} : vector<9x512xf32> to vector<1x512xf32>
    %37 = arith.mulf %35, %36 : vector<1x512xf32>
    %38 = arith.truncf %37 : vector<1x512xf32> to vector<1x512xbf16>
    %39 = tpu.concatenate %7, %11, %15, %19, %22, %26, %30, %34, %38 in 0 : vector<1x512xbf16>, vector<1x512xbf16>, vector<1x512xbf16>, vector<1x512xbf16>, vector<1x512xbf16>, vector<1x512xbf16>, vector<1x512xbf16>, vector<1x512xbf16>, vector<1x512xbf16> -> vector<9x512xbf16>
    %cst = arith.constant dense<0.000000e+00> : vector<8x512xf32>
    %40 = tpu.matmul %2, %39, %cst {dimension_numbers = #tpu.dot_dimension_numbers<[1], [0], [0], [1], [0, 0, 1, 1], [], []>} : vector<8x9xbf16>, vector<9x512xbf16>, vector<8x512xf32> -> vector<8x512xf32>
    %41 = vector.broadcast %3 : vector<8x1xf32> to vector<8x512xf32>
    %42 = arith.addf %40, %41 : vector<8x512xf32>
    %cst_7 = arith.constant 0.000000e+00 : f32
    %43 = vector.broadcast %cst_7 : f32 to vector<8x512xf32>
    %44 = arith.maximumf %42, %43 : vector<8x512xf32>
    %c0_8 = arith.constant 0 : index
    %c0_9 = arith.constant 0 : index
    %45 = vector.load %arg4[%c0_8, %c0_9] : memref<16x72xbf16, #tpu.memory_space<vmem>>, vector<16x72xbf16>
    %c0_10 = arith.constant 0 : index
    %c0_11 = arith.constant 0 : index
    %46 = vector.load %arg5[%c0_10, %c0_11] : memref<16x1xf32, #tpu.memory_space<vmem>>, vector<16x1xf32>
    %c17_i32_12 = arith.constant 17 : i32
    %47 = tpu.dynamic_rotate %44 by %c17_i32_12 dim 1 : vector<8x512xf32>, i32 -> vector<8x512xf32>
    %48 = vector.extract_strided_slice %0 {offsets = [0, 0], sizes = [1, 512], strides = [1, 1]} : vector<9x512xf32> to vector<1x512xf32>
    %49 = vector.broadcast %48 : vector<1x512xf32> to vector<8x512xf32>
    %50 = arith.mulf %47, %49 : vector<8x512xf32>
    %51 = arith.truncf %50 : vector<8x512xf32> to vector<8x512xbf16>
    %c16_i32_13 = arith.constant 16 : i32
    %52 = tpu.dynamic_rotate %44 by %c16_i32_13 dim 1 : vector<8x512xf32>, i32 -> vector<8x512xf32>
    %53 = vector.extract_strided_slice %0 {offsets = [1, 0], sizes = [1, 512], strides = [1, 1]} : vector<9x512xf32> to vector<1x512xf32>
    %54 = vector.broadcast %53 : vector<1x512xf32> to vector<8x512xf32>
    %55 = arith.mulf %52, %54 : vector<8x512xf32>
    %56 = arith.truncf %55 : vector<8x512xf32> to vector<8x512xbf16>
    %c15_i32_14 = arith.constant 15 : i32
    %57 = tpu.dynamic_rotate %44 by %c15_i32_14 dim 1 : vector<8x512xf32>, i32 -> vector<8x512xf32>
    %58 = vector.extract_strided_slice %0 {offsets = [2, 0], sizes = [1, 512], strides = [1, 1]} : vector<9x512xf32> to vector<1x512xf32>
    %59 = vector.broadcast %58 : vector<1x512xf32> to vector<8x512xf32>
    %60 = arith.mulf %57, %59 : vector<8x512xf32>
    %61 = arith.truncf %60 : vector<8x512xf32> to vector<8x512xbf16>
    %c1_i32_15 = arith.constant 1 : i32
    %62 = tpu.dynamic_rotate %44 by %c1_i32_15 dim 1 : vector<8x512xf32>, i32 -> vector<8x512xf32>
    %63 = vector.extract_strided_slice %0 {offsets = [3, 0], sizes = [1, 512], strides = [1, 1]} : vector<9x512xf32> to vector<1x512xf32>
    %64 = vector.broadcast %63 : vector<1x512xf32> to vector<8x512xf32>
    %65 = arith.mulf %62, %64 : vector<8x512xf32>
    %66 = arith.truncf %65 : vector<8x512xf32> to vector<8x512xbf16>
    %67 = vector.extract_strided_slice %0 {offsets = [4, 0], sizes = [1, 512], strides = [1, 1]} : vector<9x512xf32> to vector<1x512xf32>
    %68 = vector.broadcast %67 : vector<1x512xf32> to vector<8x512xf32>
    %69 = arith.mulf %44, %68 : vector<8x512xf32>
    %70 = arith.truncf %69 : vector<8x512xf32> to vector<8x512xbf16>
    %c511_i32_16 = arith.constant 511 : i32
    %71 = tpu.dynamic_rotate %44 by %c511_i32_16 dim 1 : vector<8x512xf32>, i32 -> vector<8x512xf32>
    %72 = vector.extract_strided_slice %0 {offsets = [5, 0], sizes = [1, 512], strides = [1, 1]} : vector<9x512xf32> to vector<1x512xf32>
    %73 = vector.broadcast %72 : vector<1x512xf32> to vector<8x512xf32>
    %74 = arith.mulf %71, %73 : vector<8x512xf32>
    %75 = arith.truncf %74 : vector<8x512xf32> to vector<8x512xbf16>
    %c497_i32_17 = arith.constant 497 : i32
    %76 = tpu.dynamic_rotate %44 by %c497_i32_17 dim 1 : vector<8x512xf32>, i32 -> vector<8x512xf32>
    %77 = vector.extract_strided_slice %0 {offsets = [6, 0], sizes = [1, 512], strides = [1, 1]} : vector<9x512xf32> to vector<1x512xf32>
    %78 = vector.broadcast %77 : vector<1x512xf32> to vector<8x512xf32>
    %79 = arith.mulf %76, %78 : vector<8x512xf32>
    %80 = arith.truncf %79 : vector<8x512xf32> to vector<8x512xbf16>
    %c496_i32_18 = arith.constant 496 : i32
    %81 = tpu.dynamic_rotate %44 by %c496_i32_18 dim 1 : vector<8x512xf32>, i32 -> vector<8x512xf32>
    %82 = vector.extract_strided_slice %0 {offsets = [7, 0], sizes = [1, 512], strides = [1, 1]} : vector<9x512xf32> to vector<1x512xf32>
    %83 = vector.broadcast %82 : vector<1x512xf32> to vector<8x512xf32>
    %84 = arith.mulf %81, %83 : vector<8x512xf32>
    %85 = arith.truncf %84 : vector<8x512xf32> to vector<8x512xbf16>
    %c495_i32_19 = arith.constant 495 : i32
    %86 = tpu.dynamic_rotate %44 by %c495_i32_19 dim 1 : vector<8x512xf32>, i32 -> vector<8x512xf32>
    %87 = vector.extract_strided_slice %0 {offsets = [8, 0], sizes = [1, 512], strides = [1, 1]} : vector<9x512xf32> to vector<1x512xf32>
    %88 = vector.broadcast %87 : vector<1x512xf32> to vector<8x512xf32>
    %89 = arith.mulf %86, %88 : vector<8x512xf32>
    %90 = arith.truncf %89 : vector<8x512xf32> to vector<8x512xbf16>
    %91 = tpu.concatenate %51, %56, %61, %66, %70, %75, %80, %85, %90 in 0 : vector<8x512xbf16>, vector<8x512xbf16>, vector<8x512xbf16>, vector<8x512xbf16>, vector<8x512xbf16>, vector<8x512xbf16>, vector<8x512xbf16>, vector<8x512xbf16>, vector<8x512xbf16> -> vector<72x512xbf16>
    %cst_20 = arith.constant dense<0.000000e+00> : vector<16x512xf32>
    %92 = tpu.matmul %45, %91, %cst_20 {dimension_numbers = #tpu.dot_dimension_numbers<[1], [0], [0], [1], [0, 0, 1, 1], [], []>} : vector<16x72xbf16>, vector<72x512xbf16>, vector<16x512xf32> -> vector<16x512xf32>
    %93 = vector.broadcast %46 : vector<16x1xf32> to vector<16x512xf32>
    %94 = arith.addf %92, %93 : vector<16x512xf32>
    %cst_21 = arith.constant 0.000000e+00 : f32
    %95 = vector.broadcast %cst_21 : f32 to vector<16x512xf32>
    %96 = arith.maximumf %94, %95 : vector<16x512xf32>
    %97 = vector.extract_strided_slice %96 {offsets = [0, 0], sizes = [16, 256], strides = [1, 1]} : vector<16x512xf32> to vector<16x256xf32>
    %cst_22 = arith.constant dense<0.000000e+00> : vector<16xf32>
    %98 = vector.multi_reduction <add>, %97, %cst_22 [1] : vector<16x256xf32> to vector<16xf32>
    %99 = vector.shape_cast %98 : vector<16xf32> to vector<16x1xf32>
    %100 = vector.extract_strided_slice %96 {offsets = [0, 256], sizes = [16, 256], strides = [1, 1]} : vector<16x512xf32> to vector<16x256xf32>
    %cst_23 = arith.constant dense<0.000000e+00> : vector<16xf32>
    %101 = vector.multi_reduction <add>, %100, %cst_23 [1] : vector<16x256xf32> to vector<16xf32>
    %102 = vector.shape_cast %101 : vector<16xf32> to vector<16x1xf32>
    %103 = tpu.concatenate %99, %102 in 1 : vector<16x1xf32>, vector<16x1xf32> -> vector<16x2xf32>
    %cst_24 = arith.constant 3.906250e-03 : f32
    %104 = vector.broadcast %cst_24 : f32 to vector<16x2xf32>
    %105 = arith.mulf %103, %104 : vector<16x2xf32>
    %c0_25 = arith.constant 0 : index
    %c0_26 = arith.constant 0 : index
    %106 = vector.load %arg6[%c0_25, %c0_26] : memref<16x10xf32, #tpu.memory_space<vmem>>, vector<16x10xf32>
    %cst_27 = arith.constant dense<0.000000e+00> : vector<2x10xf32>
    %107 = tpu.matmul %105, %106, %cst_27 {dimension_numbers = #tpu.dot_dimension_numbers<[0], [0], [1], [1], [0, 1, 1, 1], [], []>} : vector<16x2xf32>, vector<16x10xf32>, vector<2x10xf32> -> vector<2x10xf32>
    %c0_28 = arith.constant 0 : index
    %c0_29 = arith.constant 0 : index
    %108 = vector.load %arg7[%c0_28, %c0_29] : memref<1x10xf32, #tpu.memory_space<vmem>>, vector<1x10xf32>
    %109 = vector.broadcast %108 : vector<1x10xf32> to vector<2x10xf32>
    %110 = arith.addf %107, %109 : vector<2x10xf32>
    %c0_30 = arith.constant 0 : index
    %c0_31 = arith.constant 0 : index
    %111 = vector.load %arg8[%c0_30, %c0_31] : memref<2x10xf32, #tpu.memory_space<vmem>>, vector<2x10xf32>
    tpu.vector_store %arg8[%c0_30, %c0_31], %110 {strides = array<i32>} : memref<2x10xf32, #tpu.memory_space<vmem>>, vector<2x10xf32>,
    return
  }
}

</mosaic_0001>

<llo_original>
// kernel: net_forward.1
$region0: #{net_forward.1}
  #allocation0 [shape = 'u32[]', space=smem, size = 0x4, offset = 0x4, fixed_abs, tag = 'smem constant byte address 0x4 - core index']
  #allocation1 [shape = 'u32[72,128]{1,0:T(1,128)}', space=vmem, size = 0x9000, scoped, tag = 'internal scratch']
  %s0 = inlined_call_operand.vmem [shape: f32[1,512], index: 0, kind: input, shape index: {}]
  %s1 = inlined_call_operand.hbm [shape: f32[9,512], index: 1, kind: input, shape index: {}]
  %s2 = inlined_call_operand.vmem [shape: bf16[8,9], index: 2, kind: input, shape index: {}]
  %s3 = inlined_call_operand.vmem [shape: f32[8,1], index: 3, kind: input, shape index: {}]
  %s4 = inlined_call_operand.vmem [shape: bf16[16,72], index: 4, kind: input, shape index: {}]
  %s5 = inlined_call_operand.vmem [shape: f32[16,1], index: 5, kind: input, shape index: {}]
  %s6 = inlined_call_operand.vmem [shape: f32[16,10], index: 6, kind: input, shape index: {}]
  %s7 = inlined_call_operand.vmem [shape: f32[1,10], index: 7, kind: input, shape index: {}]
  %s8 = inlined_call_operand.hbm [shape: f32[2,10], index: 8, kind: output, shape index: {}]
  %s9 = sld [smem:[#allocation0]]
  $region46: #{net_forward.1} parent=0
    _
  %s11 = ssub.s32 1, %s9
  %s12 = scalar_select 0, %s11, %s9
  $region1: #{net_forward.1} parent=0
    #allocation2 [shape = 'u8[32768]{0}', space=vmem, size = 0x8000, scoped, tag = 'input window, operand 1, single buffered']
    #allocation3 [shape = 's32[1]{0}', space=sflag, size = 0x4, scoped, tag = 'scoped memory for net_forward.1']
    #allocation4 [shape = 's32[1]{0}', space=sflag, size = 0x4, scoped, tag = 'scoped memory for net_forward.1']
    #allocation5 [shape = 'u8[1024]{0}', space=vmem, size = 0x400, scoped, tag = 'output window, operand 0, single buffered']
    %13 = vsyncpa [#allocation3], 0
    %14 = vsyncpa [#allocation4], 0
    // Predicated region
    $region2: #{net_forward.1} parent=1 // pred_check
      _
    $region3: #{net_forward.1} parent=1 // pred_check_branch
      %16 = sbr.rel (0) target = $region5
    $region4: #{net_forward.1} parent=1 // pred_region
      _
    $region5: #{net_forward.1} parent=1 // pred_fallthru
      _
    // Predicated region
    $region6: #{net_forward.1} parent=1 // pred_check
      _
    $region7: #{net_forward.1} parent=1 // pred_check_branch
      %18 = sbr.rel (0) target = $region9
    $region8: #{net_forward.1} parent=1 // pred_region
      %20 = vsyncadd [#allocation3], 0
      %s21 = sshll.u32 %s1, 4
      %s22 = int_to_ptr.hbm [resolvable:$true] %s21
      %s23 = sshll.u32 [#allocation2], 4
      %s24 = int_to_ptr.vmem [resolvable:$true] %s23
      %29 = dma.hbm_to_vmem [thread:$0]  %s22, 1024, %s24, [#allocation3], 512, 512, 32
    $region9: #{net_forward.1} parent=1 // pred_fallthru
      _
    // Predicated region
    $region10: #{net_forward.1} parent=1 // pred_check
      _
    $region11: #{net_forward.1} parent=1 // pred_check_branch
      %31 = sbr.rel (0) target = $region13
    $region12: #{net_forward.1} parent=1 // pred_region
      _
    $region13: #{net_forward.1} parent=1 // pred_fallthru
      _
    // Predicated region
    $region14: #{net_forward.1} parent=1 // pred_check
      _
    $region15: #{net_forward.1} parent=1 // pred_check_branch
      %33 = sbr.rel (0) target = $region17
    $region16: #{net_forward.1} parent=1 // pred_region
      _
    $region17: #{net_forward.1} parent=1 // pred_fallthru
      _
    // Predicated region
    $region18: #{net_forward.1} parent=1 // pred_check
      _
    $region19: #{net_forward.1} parent=1 // pred_check_branch
      %35 = sbr.rel (0) target = $region21
    $region20: #{net_forward.1} parent=1 // pred_region
      _
    $region21: #{net_forward.1} parent=1 // pred_fallthru
      _
    // Predicated region
    $region22: #{net_forward.1} parent=1 // pred_check
      _
    $region23: #{net_forward.1} parent=1 // pred_check_branch
      %37 = sbr.rel (0) target = $region25
    $region24: #{net_forward.1} parent=1 // pred_region
      _
    $region25: #{net_forward.1} parent=1 // pred_fallthru
      _
    // Predicated region
    $region26: #{net_forward.1} parent=1 // pred_check
      _
    $region27: #{net_forward.1} parent=1 // pred_check_branch
      %39 = sbr.rel (0) target = $region29
    $region28: #{net_forward.1} parent=1 // pred_region
      _
    $region29: #{net_forward.1} parent=1 // pred_fallthru
      _
    // Predicated region
    $region30: #{net_forward.1} parent=1 // pred_check
      _
    $region31: #{net_forward.1} parent=1 // pred_check_branch
      %41 = sbr.rel (0) target = $region33
    $region32: #{net_forward.1} parent=1 // pred_region
      _
    $region33: #{net_forward.1} parent=1 // pred_fallthru
      _
    // Predicated region
    $region34: #{net_forward.1} parent=1 // pred_check
      _
    $region35: #{net_forward.1} parent=1 // pred_check_branch
      %43 = sbr.rel (0) target = $region37
    $region36: #{net_forward.1} parent=1 // pred_region
      %45 = dma.done [#allocation3], 1024
    $region37: #{net_forward.1} parent=1 // pred_fallthru
      _
    %v47 = vld [vmem:[#allocation2] sm:$0xff]
    %v48 = vld [vmem:[#allocation2 + $0x8] sm:$0xff]
    %v49 = vld [vmem:[#allocation2 + $0x10] sm:$0xff]
    %v50 = vld [vmem:[#allocation2 + $0x18] sm:$0xff]
    %v51 = vld [vmem:[#allocation2 + $0x20] sm:$0x1]
    %v52 = vld [vmem:[#allocation2 + $0x28] sm:$0x1]
    %v53 = vld [vmem:[#allocation2 + $0x30] sm:$0x1]
    %v54 = vld [vmem:[#allocation2 + $0x38] sm:$0x1]
    %v55 = vld [vmem:[%s0] sm:$0xf]
    %v56 = vld [vmem:[%s2] sm:$0xf]
    %v57 = vld [vmem:[%s3] sm:$0xff]
    %v59 = vperm.slane %v55, 0
    %v60 = vperm.slane %v55, 1
    %v61 = vperm.slane %v55, 2
    %v62 = vperm.slane %v55, 3
    %67 = vrot.lane.b32.xlu0 %v59, 17
    %v68 = vpop.permute.xlu0 %67
    %69 = vrot.lane.b32.xlu0 %v60, 17
    %v70 = vpop.permute.xlu0 %69
    %71 = vrot.lane.b32.xlu0 %v61, 17
    %v72 = vpop.permute.xlu0 %71
    %73 = vrot.lane.b32.xlu0 %v62, 17
    %v74 = vpop.permute.xlu0 %73
    %v75 = vlaneseq
    %v76 = vand.u32 %v75, 127
    %vm77 = vcmp.lt.s32.totalorder %v76, 17
    %v78 = vsel %vm77, %v72, %v74
    %v79 = vsel %vm77, %v70, %v72
    %v80 = vsel %vm77, %v68, %v70
    %v81 = vsel %vm77, %v74, %v68
    %v82 = vmul.f32 %v81, %v47
    %v83 = vmul.f32 %v80, %v48
    %v84 = vmul.f32 %v79, %v49
    %v85 = vmul.f32 %v78, %v50
    %v86 = vpack.c.bf16 %v83, %v82
    %v87 = vpack.c.bf16 %v85, %v84
    %88 = vrot.lane.b32.xlu0 %v59, 16
    %v89 = vpop.permute.xlu0 %88
    %90 = vrot.lane.b32.xlu0 %v60, 16
    %v91 = vpop.permute.xlu0 %90
    %92 = vrot.lane.b32.xlu0 %v61, 16
    %v93 = vpop.permute.xlu0 %92
    %94 = vrot.lane.b32.xlu0 %v62, 16
    %v95 = vpop.permute.xlu0 %94
    %vm96 = vcmp.lt.s32.totalorder %v76, 16
    %v97 = vsel %vm96, %v93, %v95
    %v98 = vsel %vm96, %v91, %v93
    %v99 = vsel %vm96, %v89, %v91
    %v100 = vsel %vm96, %v95, %v89
    %v105 = vrot.slane %v47, 1
    %v106 = vrot.slane %v48, 1
    %v107 = vrot.slane %v49, 1
    %v108 = vrot.slane %v50, 1
    %v113 = vmul.f32 %v100, %v105
    %v114 = vmul.f32 %v99, %v106
    %v115 = vmul.f32 %v98, %v107
    %v116 = vmul.f32 %v97, %v108
    %v117 = vpack.c.bf16 %v114, %v113
    %v118 = vpack.c.bf16 %v116, %v115
    %119 = vrot.lane.b32.xlu0 %v59, 15
    %v120 = vpop.permute.xlu0 %119
    %121 = vrot.lane.b32.xlu0 %v60, 15
    %v122 = vpop.permute.xlu0 %121
    %123 = vrot.lane.b32.xlu0 %v61, 15
    %v124 = vpop.permute.xlu0 %123
    %125 = vrot.lane.b32.xlu0 %v62, 15
    %v126 = vpop.permute.xlu0 %125
    %vm127 = vcmp.lt.s32.totalorder %v76, 15
    %v128 = vsel %vm127, %v124, %v126
    %v129 = vsel %vm127, %v122, %v124
    %v130 = vsel %vm127, %v120, %v122
    %v131 = vsel %vm127, %v126, %v120
    %v132 = vrot.slane %v47, 2
    %v133 = vrot.slane %v48, 2
    %v134 = vrot.slane %v49, 2
    %v135 = vrot.slane %v50, 2
    %v140 = vmul.f32 %v131, %v132
    %v141 = vmul.f32 %v130, %v133
    %v142 = vmul.f32 %v129, %v134
    %v143 = vmul.f32 %v128, %v135
    %v144 = vpack.c.bf16 %v141, %v140
    %v145 = vpack.c.bf16 %v143, %v142
    %146 = vrot.lane.b32.xlu0 %v59, 1
    %v147 = vpop.permute.xlu0 %146
    %148 = vrot.lane.b32.xlu0 %v60, 1
    %v149 = vpop.permute.xlu0 %148
    %150 = vrot.lane.b32.xlu0 %v61, 1
    %v151 = vpop.permute.xlu0 %150
    %152 = vrot.lane.b32.xlu0 %v62, 1
    %v153 = vpop.permute.xlu0 %152
    %vm154 = vcmp.lt.s32.totalorder %v76, 1
    %v155 = vsel %vm154, %v151, %v153
    %v156 = vsel %vm154, %v149, %v151
    %v157 = vsel %vm154, %v147, %v149
    %v158 = vsel %vm154, %v153, %v147
    %v159 = vrot.slane %v47, 3
    %v160 = vrot.slane %v48, 3
    %v161 = vrot.slane %v49, 3
    %v162 = vrot.slane %v50, 3
    %v167 = vmul.f32 %v158, %v159
    %v168 = vmul.f32 %v157, %v160
    %v169 = vmul.f32 %v156, %v161
    %v170 = vmul.f32 %v155, %v162
    %v171 = vpack.c.bf16 %v168, %v167
    %v172 = vpack.c.bf16 %v170, %v169
    %173 = vst [vmem:[#allocation1] sm:$0xff] %v47
    %174 = vst [vmem:[#allocation1 + $0x9] sm:$0xff] %v48
    %175 = vst [vmem:[#allocation1 + $0x12] sm:$0xff] %v49
    %176 = vst [vmem:[#allocation1 + $0x1b] sm:$0xff] %v50
    %s177 = scalar_lea.vmem [#allocation1], 4
    %v178 = vld [vmem:[%s177] ss:$9 sm:$0xff]
    %v180 = vmul.f32 %v55, %v178
    %v182 = vperm.slane %v180, 0
    %v183 = vperm.slane %v180, 1
    %v184 = vperm.slane %v180, 2
    %v185 = vperm.slane %v180, 3
    %v190 = vpack.c.bf16 %v183, %v182
    %v191 = vpack.c.bf16 %v185, %v184
    %192 = vrot.lane.b32.xlu0 %v59, 127
    %v193 = vpop.permute.xlu0 %192
    %194 = vrot.lane.b32.xlu0 %v60, 127
    %v195 = vpop.permute.xlu0 %194
    %196 = vrot.lane.b32.xlu0 %v61, 127
    %v197 = vpop.permute.xlu0 %196
    %198 = vrot.lane.b32.xlu0 %v62, 127
    %v199 = vpop.permute.xlu0 %198
    %vm200 = vcmp.lt.s32.totalorder %v76, 127
    %v201 = vsel %vm200, %v197, %v199
    %v202 = vsel %vm200, %v195, %v197
    %v203 = vsel %vm200, %v193, %v195
    %v204 = vsel %vm200, %v199, %v193
    %v205 = vrot.slane %v47, 5
    %v206 = vrot.slane %v48, 5
    %v207 = vrot.slane %v49, 5
    %v208 = vrot.slane %v50, 5
    %v213 = vmul.f32 %v203, %v205
    %v214 = vmul.f32 %v202, %v206
    %v215 = vmul.f32 %v201, %v207
    %v216 = vmul.f32 %v204, %v208
    %v217 = vpack.c.bf16 %v214, %v213
    %v218 = vpack.c.bf16 %v216, %v215
    %219 = vrot.lane.b32.xlu0 %v59, 113
    %v220 = vpop.permute.xlu0 %219
    %221 = vrot.lane.b32.xlu0 %v60, 113
    %v222 = vpop.permute.xlu0 %221
    %223 = vrot.lane.b32.xlu0 %v61, 113
    %v224 = vpop.permute.xlu0 %223
    %225 = vrot.lane.b32.xlu0 %v62, 113
    %v226 = vpop.permute.xlu0 %225
    %vm227 = vcmp.lt.s32.totalorder %v76, 113
    %v228 = vsel %vm227, %v224, %v226
    %v229 = vsel %vm227, %v222, %v224
    %v230 = vsel %vm227, %v220, %v222
    %v231 = vsel %vm227, %v226, %v220
    %v232 = vrot.slane %v47, 6
    %v233 = vrot.slane %v48, 6
    %v234 = vrot.slane %v49, 6
    %v235 = vrot.slane %v50, 6
    %v240 = vmul.f32 %v230, %v232
    %v241 = vmul.f32 %v229, %v233
    %v242 = vmul.f32 %v228, %v234
    %v243 = vmul.f32 %v231, %v235
    %v244 = vpack.c.bf16 %v241, %v240
    %v245 = vpack.c.bf16 %v243, %v242
    %246 = vrot.lane.b32.xlu0 %v59, 112
    %v247 = vpop.permute.xlu0 %246
    %248 = vrot.lane.b32.xlu0 %v60, 112
    %v249 = vpop.permute.xlu0 %248
    %250 = vrot.lane.b32.xlu0 %v61, 112
    %v251 = vpop.permute.xlu0 %250
    %252 = vrot.lane.b32.xlu0 %v62, 112
    %v253 = vpop.permute.xlu0 %252
    %vm254 = vcmp.lt.s32.totalorder %v76, 112
    %v255 = vsel %vm254, %v251, %v253
    %v256 = vsel %vm254, %v249, %v251
    %v257 = vsel %vm254, %v247, %v249
    %v258 = vsel %vm254, %v253, %v247
    %v259 = vrot.slane %v47, 7
    %v260 = vrot.slane %v48, 7
    %v261 = vrot.slane %v49, 7
    %v262 = vrot.slane %v50, 7
    %v267 = vmul.f32 %v257, %v259
    %v268 = vmul.f32 %v256, %v260
    %v269 = vmul.f32 %v255, %v261
    %v270 = vmul.f32 %v258, %v262
    %v271 = vpack.c.bf16 %v268, %v267
    %v272 = vpack.c.bf16 %v270, %v269
    %273 = vrot.lane.b32.xlu0 %v59, 111
    %v274 = vpop.permute.xlu0 %273
    %275 = vrot.lane.b32.xlu0 %v60, 111
    %v276 = vpop.permute.xlu0 %275
    %277 = vrot.lane.b32.xlu0 %v61, 111
    %v278 = vpop.permute.xlu0 %277
    %279 = vrot.lane.b32.xlu0 %v62, 111
    %v280 = vpop.permute.xlu0 %279
    %vm281 = vcmp.lt.s32.totalorder %v76, 111
    %v282 = vsel %vm281, %v278, %v280
    %v283 = vsel %vm281, %v276, %v278
    %v284 = vsel %vm281, %v274, %v276
    %v285 = vsel %vm281, %v280, %v274
    %v286 = vmul.f32 %v284, %v51
    %v287 = vmul.f32 %v283, %v52
    %v288 = vmul.f32 %v282, %v53
    %v289 = vmul.f32 %v285, %v54
    %v290 = vpack.c.bf16 %v287, %v286
    %v291 = vpack.c.bf16 %v289, %v288
    %v294 = vunpack.c.l.b16 %v86
    %v295 = vunpack.c.h.b16 %v86
    %v296 = vunpack.c.l.b16 %v87
    %v297 = vunpack.c.h.b16 %v87
    %v298 = vpack.c.b16 %v294, %v294
    %v299 = vpack.c.b16 %v295, %v295
    %v300 = vpack.c.b16 %v296, %v296
    %v301 = vpack.c.b16 %v297, %v297
    %v308 = vunpack.c.l.b16 %v117
    %v309 = vunpack.c.h.b16 %v117
    %v310 = vunpack.c.l.b16 %v118
    %v311 = vunpack.c.h.b16 %v118
    %v312 = vpack.c.b16 %v308, %v308
    %v313 = vpack.c.b16 %v309, %v309
    %v314 = vpack.c.b16 %v310, %v310
    %v315 = vpack.c.b16 %v311, %v311
    %v317 = vshll.u32 %v312, 16
    %v320 = vshll.u32 %v313, 16
    %v323 = vshll.u32 %v314, 16
    %v326 = vshll.u32 %v315, 16
    %v334 = vunpack.c.l.b16 %v144
    %v335 = vunpack.c.h.b16 %v144
    %v336 = vunpack.c.l.b16 %v145
    %v337 = vunpack.c.h.b16 %v145
    %v338 = vpack.c.b16 %v334, %v334
    %v339 = vpack.c.b16 %v335, %v335
    %v340 = vpack.c.b16 %v336, %v336
    %v341 = vpack.c.b16 %v337, %v337
    %v342 = vrot.slane %v338, 7
    %v343 = vrot.slane %v339, 7
    %v344 = vrot.slane %v340, 7
    %v345 = vrot.slane %v341, 7
    %v348 = vunpack.c.l.b16 %v171
    %v349 = vunpack.c.h.b16 %v171
    %v350 = vunpack.c.l.b16 %v172
    %v351 = vunpack.c.h.b16 %v172
    %v352 = vpack.c.b16 %v348, %v348
    %v353 = vpack.c.b16 %v349, %v349
    %v354 = vpack.c.b16 %v350, %v350
    %v355 = vpack.c.b16 %v351, %v351
    %v357 = vshll.u32 %v352, 16
    %v359 = vrot.slane %v357, 7
    %v361 = vshll.u32 %v353, 16
    %v363 = vrot.slane %v361, 7
    %v365 = vshll.u32 %v354, 16
    %v367 = vrot.slane %v365, 7
    %v369 = vshll.u32 %v355, 16
    %v371 = vrot.slane %v369, 7
    %v378 = vunpack.c.l.b16 %v190
    %v379 = vunpack.c.h.b16 %v190
    %v380 = vunpack.c.l.b16 %v191
    %v381 = vunpack.c.h.b16 %v191
    %v382 = vpack.c.b16 %v378, %v378
    %v383 = vpack.c.b16 %v379, %v379
    %v384 = vpack.c.b16 %v380, %v380
    %v385 = vpack.c.b16 %v381, %v381
    %v386 = vrot.slane %v382, 6
    %v387 = vrot.slane %v383, 6
    %v388 = vrot.slane %v384, 6
    %v389 = vrot.slane %v385, 6
    %v392 = vunpack.c.l.b16 %v217
    %v393 = vunpack.c.h.b16 %v217
    %v394 = vunpack.c.l.b16 %v218
    %v395 = vunpack.c.h.b16 %v218
    %v396 = vpack.c.b16 %v392, %v392
    %v397 = vpack.c.b16 %v393, %v393
    %v398 = vpack.c.b16 %v394, %v394
    %v399 = vpack.c.b16 %v395, %v395
    %v401 = vshll.u32 %v396, 16
    %v403 = vrot.slane %v401, 6
    %v405 = vshll.u32 %v397, 16
    %v407 = vrot.slane %v405, 6
    %v409 = vshll.u32 %v398, 16
    %v411 = vrot.slane %v409, 6
    %v413 = vshll.u32 %v399, 16
    %v415 = vrot.slane %v413, 6
    %v422 = vunpack.c.l.b16 %v244
    %v423 = vunpack.c.h.b16 %v244
    %v424 = vunpack.c.l.b16 %v245
    %v425 = vunpack.c.h.b16 %v245
    %v426 = vpack.c.b16 %v422, %v422
    %v427 = vpack.c.b16 %v423, %v423
    %v428 = vpack.c.b16 %v424, %v424
    %v429 = vpack.c.b16 %v425, %v425
    %v430 = vrot.slane %v426, 5
    %v431 = vrot.slane %v427, 5
    %v432 = vrot.slane %v428, 5
    %v433 = vrot.slane %v429, 5
    %v436 = vunpack.c.l.b16 %v271
    %v437 = vunpack.c.h.b16 %v271
    %v438 = vunpack.c.l.b16 %v272
    %v439 = vunpack.c.h.b16 %v272
    %v440 = vpack.c.b16 %v436, %v436
    %v441 = vpack.c.b16 %v437, %v437
    %v442 = vpack.c.b16 %v438, %v438
    %v443 = vpack.c.b16 %v439, %v439
    %v445 = vshll.u32 %v440, 16
    %v447 = vrot.slane %v445, 5
    %v449 = vshll.u32 %v441, 16
    %v451 = vrot.slane %v449, 5
    %v453 = vshll.u32 %v442, 16
    %v455 = vrot.slane %v453, 5
    %v457 = vshll.u32 %v443, 16
    %v459 = vrot.slane %v457, 5
    %v466 = vunpack.c.l.b16 %v290
    %v467 = vunpack.c.h.b16 %v290
    %v468 = vunpack.c.l.b16 %v291
    %v469 = vunpack.c.h.b16 %v291
    %v470 = vpack.c.b16 %v466, %v466
    %v471 = vpack.c.b16 %v467, %v467
    %v472 = vpack.c.b16 %v468, %v468
    %v473 = vpack.c.b16 %v469, %v469
    %vm474 = vcmask 1040384
    %vm475 = vsmask.f32 256
    %vm476 = vmand %vm474, %vm475
    %v477 = vsel %vm476, %v298, %v317
    %v478 = vsel %vm476, %v299, %v320
    %v479 = vsel %vm476, %v300, %v323
    %v480 = vsel %vm476, %v301, %v326
    %vm481 = vcmask 1040384
    %v484 = vsel %vm481, %v477, %v342
    %v488 = vsel %vm481, %v478, %v343
    %v492 = vsel %vm481, %v479, %v344
    %v496 = vsel %vm481, %v480, %v345
    %vm498 = vcmask 1041408
    %vm499 = vsmask.f32 1280
    %vm500 = vmand %vm498, %vm499
    %v501 = vsel %vm500, %v484, %v359
    %v502 = vsel %vm500, %v488, %v363
    %v503 = vsel %vm500, %v492, %v367
    %v504 = vsel %vm500, %v496, %v371
    %vm505 = vcmask 1041408
    %v508 = vsel %vm505, %v501, %v386
    %v512 = vsel %vm505, %v502, %v387
    %v516 = vsel %vm505, %v503, %v388
    %v520 = vsel %vm505, %v504, %v389
    %vm522 = vcmask 1042432
    %vm523 = vsmask.f32 2304
    %vm524 = vmand %vm522, %vm523
    %v525 = vsel %vm524, %v508, %v403
    %v526 = vsel %vm524, %v512, %v407
    %v527 = vsel %vm524, %v516, %v411
    %v528 = vsel %vm524, %v520, %v415
    %vm529 = vcmask 1042432
    %v532 = vsel %vm529, %v525, %v430
    %v536 = vsel %vm529, %v526, %v431
    %v540 = vsel %vm529, %v527, %v432
    %v544 = vsel %vm529, %v528, %v433
    %vm546 = vcmask 1043456
    %vm547 = vsmask.f32 3328
    %vm548 = vmand %vm546, %vm547
    %v549 = vsel %vm548, %v532, %v447
    %v550 = vsel %vm548, %v536, %v451
    %v551 = vsel %vm548, %v540, %v455
    %v552 = vsel %vm548, %v544, %v459
    %vm553 = vcmask 1043456
    %v556 = vsel %vm553, %v549, %v470
    %v559 = vsel %vm553, %v550, %v471
    %v562 = vsel %vm553, %v551, %v472
    %v565 = vsel %vm553, %v552, %v473
    %567 = vset.pattern.permute.xlu0 0
    %568 = vperm.xlu0 %567, %v57
    %v569 = vpop.permute.xlu0 %568
    %vm571 = vcmask 72704
    %v573 = vsel %vm571, %v56, 0
    %vm575 = vcmask 1044480
    %v576 = vsel %vm553, 4294967295, 65535
    %v577 = vsel %vm575, %v576, 0
    %v578 = vand.u32 %v556, %v577
    %v580 = vand.u32 %v559, %v577
    %v582 = vand.u32 %v562, %v577
    %v584 = vand.u32 %v565, %v577
    %586 = vmatpush.bf16.msra.mxu0 0
    %587 = vmatpush.bf16.msra.mxu0 0
    %588 = vmatpush.bf16.msra.mxu0 0
    %589 = vmatpush.bf16.msra.mxu0 0
    %590 = vmatpush.bf16.msra.mxu0 0
    %591 = vmatpush.bf16.msra.mxu0 0
    %592 = vmatpush.bf16.msra.mxu0 0
    %593 = vmatpush.bf16.msra.mxu0 %v578
    %594 = vmatmul.bf16.gmra.mxu0 %v573
    %v595 = vpop.f32.mrf.mxu0
    %v596 = vadd.f32 %v569, %v595
    %v597 = vpop.f32.mrf.mxu0
    %598 = vdwg.mxu0
    %599 = vmatpush.bf16.msra.mxu0 0
    %600 = vmatpush.bf16.msra.mxu0 0
    %601 = vmatpush.bf16.msra.mxu0 0
    %602 = vmatpush.bf16.msra.mxu0 0
    %603 = vmatpush.bf16.msra.mxu0 0
    %604 = vmatpush.bf16.msra.mxu0 0
    %605 = vmatpush.bf16.msra.mxu0 0
    %606 = vmatpush.bf16.msra.mxu0 %v580
    %607 = vmatmul.bf16.gmra.mxu0 %v573
    %v608 = vpop.f32.mrf.mxu0
    %v609 = vadd.f32 %v569, %v608
    %v610 = vpop.f32.mrf.mxu0
    %611 = vdwg.mxu0
    %612 = vmatpush.bf16.msra.mxu0 0
    %613 = vmatpush.bf16.msra.mxu0 0
    %614 = vmatpush.bf16.msra.mxu0 0
    %615 = vmatpush.bf16.msra.mxu0 0
    %616 = vmatpush.bf16.msra.mxu0 0
    %617 = vmatpush.bf16.msra.mxu0 0
    %618 = vmatpush.bf16.msra.mxu0 0
    %619 = vmatpush.bf16.msra.mxu0 %v582
    %620 = vmatmul.bf16.gmra.mxu0 %v573
    %v621 = vpop.f32.mrf.mxu0
    %v622 = vadd.f32 %v569, %v621
    %v623 = vpop.f32.mrf.mxu0
    %624 = vdwg.mxu0
    %625 = vmatpush.bf16.msra.mxu0 0
    %626 = vmatpush.bf16.msra.mxu0 0
    %627 = vmatpush.bf16.msra.mxu0 0
    %628 = vmatpush.bf16.msra.mxu0 0
    %629 = vmatpush.bf16.msra.mxu0 0
    %630 = vmatpush.bf16.msra.mxu0 0
    %631 = vmatpush.bf16.msra.mxu0 0
    %632 = vmatpush.bf16.msra.mxu0 %v584
    %633 = vmatmul.bf16.gmra.mxu0 %v573
    %v634 = vpop.f32.mrf.mxu0
    %v635 = vadd.f32 %v569, %v634
    %v636 = vpop.f32.mrf.mxu0
    %637 = vdwg.mxu0
    %v638 = vmax.f32 %v596, 0.0
    %v639 = vmax.f32 %v609, 0.0
    %v640 = vmax.f32 %v622, 0.0
    %v641 = vmax.f32 %v635, 0.0
    %v642 = vld [vmem:[%s4] sm:$0xf]
    %v643 = vld [vmem:[%s4 + $0x4] sm:$0xf]
    %v644 = vld [vmem:[%s5] sm:$0xff]
    %v645 = vld [vmem:[%s5 + $0x8] sm:$0xff]
    %646 = vrot.lane.b32.xlu0 %v638, 17
    %v647 = vpop.permute.xlu0 %646
    %648 = vrot.lane.b32.xlu0 %v639, 17
    %v649 = vpop.permute.xlu0 %648
    %650 = vrot.lane.b32.xlu0 %v640, 17
    %v651 = vpop.permute.xlu0 %650
    %652 = vrot.lane.b32.xlu0 %v641, 17
    %v653 = vpop.permute.xlu0 %652
    %v654 = vsel %vm77, %v651, %v653
    %v655 = vsel %vm77, %v649, %v651
    %v656 = vsel %vm77, %v647, %v649
    %v657 = vsel %vm77, %v653, %v647
    %v658 = vperm.slane %v47, 0
    %v659 = vperm.slane %v48, 0
    %v660 = vperm.slane %v49, 0
    %v661 = vperm.slane %v50, 0
    %v662 = vmul.f32 %v657, %v658
    %v663 = vmul.f32 %v656, %v659
    %v664 = vmul.f32 %v655, %v660
    %v665 = vmul.f32 %v654, %v661
    %v666 = vpack.c.bf16 %v663, %v662
    %v667 = vpack.c.bf16 %v665, %v664
    %668 = vrot.lane.b32.xlu0 %v638, 16
    %v669 = vpop.permute.xlu0 %668
    %670 = vrot.lane.b32.xlu0 %v639, 16
    %v671 = vpop.permute.xlu0 %670
    %672 = vrot.lane.b32.xlu0 %v640, 16
    %v673 = vpop.permute.xlu0 %672
    %674 = vrot.lane.b32.xlu0 %v641, 16
    %v675 = vpop.permute.xlu0 %674
    %v676 = vsel %vm96, %v673, %v675
    %v677 = vsel %vm96, %v671, %v673
    %v678 = vsel %vm96, %v669, %v671
    %v679 = vsel %vm96, %v675, %v669
    %v680 = vperm.slane %v47, 1
    %v681 = vperm.slane %v48, 1
    %v682 = vperm.slane %v49, 1
    %v683 = vperm.slane %v50, 1
    %v684 = vmul.f32 %v679, %v680
    %v685 = vmul.f32 %v678, %v681
    %v686 = vmul.f32 %v677, %v682
    %v687 = vmul.f32 %v676, %v683
    %v688 = vpack.c.bf16 %v685, %v684
    %v689 = vpack.c.bf16 %v687, %v686
    %690 = vrot.lane.b32.xlu0 %v638, 15
    %v691 = vpop.permute.xlu0 %690
    %692 = vrot.lane.b32.xlu0 %v639, 15
    %v693 = vpop.permute.xlu0 %692
    %694 = vrot.lane.b32.xlu0 %v640, 15
    %v695 = vpop.permute.xlu0 %694
    %696 = vrot.lane.b32.xlu0 %v641, 15
    %v697 = vpop.permute.xlu0 %696
    %v698 = vsel %vm127, %v695, %v697
    %v699 = vsel %vm127, %v693, %v695
    %v700 = vsel %vm127, %v691, %v693
    %v701 = vsel %vm127, %v697, %v691
    %v702 = vperm.slane %v47, 2
    %v703 = vperm.slane %v48, 2
    %v704 = vperm.slane %v49, 2
    %v705 = vperm.slane %v50, 2
    %v706 = vmul.f32 %v701, %v702
    %v707 = vmul.f32 %v700, %v703
    %v708 = vmul.f32 %v699, %v704
    %v709 = vmul.f32 %v698, %v705
    %v710 = vpack.c.bf16 %v707, %v706
    %v711 = vpack.c.bf16 %v709, %v708
    %712 = vrot.lane.b32.xlu0 %v638, 1
    %v713 = vpop.permute.xlu0 %712
    %714 = vrot.lane.b32.xlu0 %v639, 1
    %v715 = vpop.permute.xlu0 %714
    %716 = vrot.lane.b32.xlu0 %v640, 1
    %v717 = vpop.permute.xlu0 %716
    %718 = vrot.lane.b32.xlu0 %v641, 1
    %v719 = vpop.permute.xlu0 %718
    %v720 = vsel %vm154, %v717, %v719
    %v721 = vsel %vm154, %v715, %v717
    %v722 = vsel %vm154, %v713, %v715
    %v723 = vsel %vm154, %v719, %v713
    %v724 = vperm.slane %v47, 3
    %v725 = vperm.slane %v48, 3
    %v726 = vperm.slane %v49, 3
    %v727 = vperm.slane %v50, 3
    %v728 = vmul.f32 %v723, %v724
    %v729 = vmul.f32 %v722, %v725
    %v730 = vmul.f32 %v721, %v726
    %v731 = vmul.f32 %v720, %v727
    %v732 = vpack.c.bf16 %v729, %v728
    %v733 = vpack.c.bf16 %v731, %v730
    %v734 = vperm.slane %v47, 4
    %v735 = vperm.slane %v48, 4
    %v736 = vperm.slane %v49, 4
    %v737 = vperm.slane %v50, 4
    %v738 = vmul.f32 %v638, %v734
    %v739 = vmul.f32 %v639, %v735
    %v740 = vmul.f32 %v640, %v736
    %v741 = vmul.f32 %v641, %v737
    %v742 = vpack.c.bf16 %v739, %v738
    %v743 = vpack.c.bf16 %v741, %v740
    %744 = vrot.lane.b32.xlu0 %v638, 127
    %v745 = vpop.permute.xlu0 %744
    %746 = vrot.lane.b32.xlu0 %v639, 127
    %v747 = vpop.permute.xlu0 %746
    %748 = vrot.lane.b32.xlu0 %v640, 127
    %v749 = vpop.permute.xlu0 %748
    %750 = vrot.lane.b32.xlu0 %v641, 127
    %v751 = vpop.permute.xlu0 %750
    %v752 = vsel %vm200, %v749, %v751
    %v753 = vsel %vm200, %v747, %v749
    %v754 = vsel %vm200, %v745, %v747
    %v755 = vsel %vm200, %v751, %v745
    %v756 = vperm.slane %v47, 5
    %v757 = vperm.slane %v48, 5
    %v758 = vperm.slane %v49, 5
    %v759 = vperm.slane %v50, 5
    %v760 = vmul.f32 %v754, %v756
    %v761 = vmul.f32 %v753, %v757
    %v762 = vmul.f32 %v752, %v758
    %v763 = vmul.f32 %v755, %v759
    %v764 = vpack.c.bf16 %v761, %v760
    %v765 = vpack.c.bf16 %v763, %v762
    %766 = vrot.lane.b32.xlu0 %v638, 113
    %v767 = vpop.permute.xlu0 %766
    %768 = vrot.lane.b32.xlu0 %v639, 113
    %v769 = vpop.permute.xlu0 %768
    %770 = vrot.lane.b32.xlu0 %v640, 113
    %v771 = vpop.permute.xlu0 %770
    %772 = vrot.lane.b32.xlu0 %v641, 113
    %v773 = vpop.permute.xlu0 %772
    %v774 = vsel %vm227, %v771, %v773
    %v775 = vsel %vm227, %v769, %v771
    %v776 = vsel %vm227, %v767, %v769
    %v777 = vsel %vm227, %v773, %v767
    %v778 = vperm.slane %v47, 6
    %v779 = vperm.slane %v48, 6
    %v780 = vperm.slane %v49, 6
    %v781 = vperm.slane %v50, 6
    %v782 = vmul.f32 %v776, %v778
    %v783 = vmul.f32 %v775, %v779
    %v784 = vmul.f32 %v774, %v780
    %v785 = vmul.f32 %v777, %v781
    %v786 = vpack.c.bf16 %v783, %v782
    %v787 = vpack.c.bf16 %v785, %v784
    %788 = vrot.lane.b32.xlu0 %v638, 112
    %v789 = vpop.permute.xlu0 %788
    %790 = vrot.lane.b32.xlu0 %v639, 112
    %v791 = vpop.permute.xlu0 %790
    %792 = vrot.lane.b32.xlu0 %v640, 112
    %v793 = vpop.permute.xlu0 %792
    %794 = vrot.lane.b32.xlu0 %v641, 112
    %v795 = vpop.permute.xlu0 %794
    %v796 = vsel %vm254, %v793, %v795
    %v797 = vsel %vm254, %v791, %v793
    %v798 = vsel %vm254, %v789, %v791
    %v799 = vsel %vm254, %v795, %v789
    %v800 = vperm.slane %v47, 7
    %v801 = vperm.slane %v48, 7
    %v802 = vperm.slane %v49, 7
    %v803 = vperm.slane %v50, 7
    %v804 = vmul.f32 %v798, %v800
    %v805 = vmul.f32 %v797, %v801
    %v806 = vmul.f32 %v796, %v802
    %v807 = vmul.f32 %v799, %v803
    %v808 = vpack.c.bf16 %v805, %v804
    %v809 = vpack.c.bf16 %v807, %v806
    %810 = vrot.lane.b32.xlu0 %v638, 111
    %v811 = vpop.permute.xlu0 %810
    %812 = vrot.lane.b32.xlu0 %v639, 111
    %v813 = vpop.permute.xlu0 %812
    %814 = vrot.lane.b32.xlu0 %v640, 111
    %v815 = vpop.permute.xlu0 %814
    %816 = vrot.lane.b32.xlu0 %v641, 111
    %v817 = vpop.permute.xlu0 %816
    %v818 = vsel %vm281, %v815, %v817
    %v819 = vsel %vm281, %v813, %v815
    %v820 = vsel %vm281, %v811, %v813
    %v821 = vsel %vm281, %v817, %v811
    %v822 = vperm.slane %v51, 0
    %v823 = vperm.slane %v52, 0
    %v824 = vperm.slane %v53, 0
    %v825 = vperm.slane %v54, 0
    %v826 = vmul.f32 %v820, %v822
    %v827 = vmul.f32 %v819, %v823
    %v828 = vmul.f32 %v818, %v824
    %v829 = vmul.f32 %v821, %v825
    %v830 = vpack.c.bf16 %v827, %v826
    %v831 = vpack.c.bf16 %v829, %v828
    %v834 = vunpack.c.l.b16 %v666
    %v835 = vunpack.c.h.b16 %v666
    %v836 = vunpack.c.l.b16 %v667
    %v837 = vunpack.c.h.b16 %v667
    %v838 = vpack.c.b16 %v834, %v834
    %v839 = vpack.c.b16 %v835, %v835
    %v840 = vpack.c.b16 %v836, %v836
    %v841 = vpack.c.b16 %v837, %v837
    %v844 = vunpack.c.l.b16 %v688
    %v845 = vunpack.c.h.b16 %v688
    %v846 = vunpack.c.l.b16 %v689
    %v847 = vunpack.c.h.b16 %v689
    %v848 = vpack.c.b16 %v844, %v844
    %v849 = vpack.c.b16 %v845, %v845
    %v850 = vpack.c.b16 %v846, %v846
    %v851 = vpack.c.b16 %v847, %v847
    %v854 = vunpack.c.l.b16 %v710
    %v855 = vunpack.c.h.b16 %v710
    %v856 = vunpack.c.l.b16 %v711
    %v857 = vunpack.c.h.b16 %v711
    %v858 = vpack.c.b16 %v854, %v854
    %v859 = vpack.c.b16 %v855, %v855
    %v860 = vpack.c.b16 %v856, %v856
    %v861 = vpack.c.b16 %v857, %v857
    %v864 = vunpack.c.l.b16 %v732
    %v865 = vunpack.c.h.b16 %v732
    %v866 = vunpack.c.l.b16 %v733
    %v867 = vunpack.c.h.b16 %v733
    %v868 = vpack.c.b16 %v864, %v864
    %v869 = vpack.c.b16 %v865, %v865
    %v870 = vpack.c.b16 %v866, %v866
    %v871 = vpack.c.b16 %v867, %v867
    %v874 = vunpack.c.l.b16 %v742
    %v875 = vunpack.c.h.b16 %v742
    %v876 = vunpack.c.l.b16 %v743
    %v877 = vunpack.c.h.b16 %v743
    %v878 = vpack.c.b16 %v874, %v874
    %v879 = vpack.c.b16 %v875, %v875
    %v880 = vpack.c.b16 %v876, %v876
    %v881 = vpack.c.b16 %v877, %v877
    %v884 = vunpack.c.l.b16 %v764
    %v885 = vunpack.c.h.b16 %v764
    %v886 = vunpack.c.l.b16 %v765
    %v887 = vunpack.c.h.b16 %v765
    %v888 = vpack.c.b16 %v884, %v884
    %v889 = vpack.c.b16 %v885, %v885
    %v890 = vpack.c.b16 %v886, %v886
    %v891 = vpack.c.b16 %v887, %v887
    %v894 = vunpack.c.l.b16 %v786
    %v895 = vunpack.c.h.b16 %v786
    %v896 = vunpack.c.l.b16 %v787
    %v897 = vunpack.c.h.b16 %v787
    %v898 = vpack.c.b16 %v894, %v894
    %v899 = vpack.c.b16 %v895, %v895
    %v900 = vpack.c.b16 %v896, %v896
    %v901 = vpack.c.b16 %v897, %v897
    %v904 = vunpack.c.l.b16 %v808
    %v905 = vunpack.c.h.b16 %v808
    %v906 = vunpack.c.l.b16 %v809
    %v907 = vunpack.c.h.b16 %v809
    %v908 = vpack.c.b16 %v904, %v904
    %v909 = vpack.c.b16 %v905, %v905
    %v910 = vpack.c.b16 %v906, %v906
    %v911 = vpack.c.b16 %v907, %v907
    %v914 = vunpack.c.l.b16 %v830
    %v915 = vunpack.c.h.b16 %v830
    %v916 = vunpack.c.l.b16 %v831
    %v917 = vunpack.c.h.b16 %v831
    %v918 = vpack.c.b16 %v914, %v914
    %v919 = vpack.c.b16 %v915, %v915
    %v920 = vpack.c.b16 %v916, %v916
    %v921 = vpack.c.b16 %v917, %v917
    %v924 = vsel %vm553, %v838, %v848
    %v928 = vsel %vm553, %v839, %v849
    %v932 = vsel %vm553, %v840, %v850
    %v936 = vsel %vm553, %v841, %v851
    %v940 = vsel %vm553, %v858, %v868
    %v944 = vsel %vm553, %v859, %v869
    %v948 = vsel %vm553, %v860, %v870
    %v952 = vsel %vm553, %v861, %v871
    %v956 = vsel %vm553, %v878, %v888
    %v960 = vsel %vm553, %v879, %v889
    %v964 = vsel %vm553, %v880, %v890
    %v968 = vsel %vm553, %v881, %v891
    %v972 = vsel %vm553, %v898, %v908
    %v976 = vsel %vm553, %v899, %v909
    %v980 = vsel %vm553, %v900, %v910
    %v984 = vsel %vm553, %v901, %v911
    %987 = vset.pattern.permute.xlu0 0
    %988 = vperm.xlu0 %987, %v644
    %v989 = vpop.permute.xlu0 %988
    %992 = vset.pattern.permute.xlu0 0
    %993 = vperm.xlu0 %992, %v645
    %v994 = vpop.permute.xlu0 %993
    %v998 = vunpack.c.l.b16 %v642
    %v999 = vunpack.c.l.b16 %v643
    %v1000 = vpack.c.b16 %v999, %v998
    %vm1001 = vcmask 588800
    %v1003 = vsel %vm1001, %v1000, 0
    %v1006 = vsel %vm553, %v918, 0
    %v1009 = vsel %vm553, %v919, 0
    %v1012 = vsel %vm553, %v920, 0
    %v1015 = vsel %vm553, %v921, 0
    %1017 = vmatpush.bf16.msra.mxu0 0
    %1018 = vmatpush.bf16.msra.mxu0 0
    %1019 = vmatpush.bf16.msra.mxu0 0
    %1020 = vmatpush.bf16.msra.mxu0 %v1006
    %1021 = vmatpush.bf16.msra.mxu0 %v972
    %1022 = vmatpush.bf16.msra.mxu0 %v956
    %1023 = vmatpush.bf16.msra.mxu0 %v940
    %1024 = vmatpush.bf16.msra.mxu0 %v924
    %1025 = vmatmul.bf16.gmra.mxu0 %v1003
    %v1026 = vpop.f32.mrf.mxu0
    %v1027 = vadd.f32 %v989, %v1026
    %v1028 = vpop.f32.mrf.mxu0
    %v1029 = vadd.f32 %v994, %v1028
    %1030 = vdwg.mxu0
    %1031 = vmatpush.bf16.msra.mxu0 0
    %1032 = vmatpush.bf16.msra.mxu0 0
    %1033 = vmatpush.bf16.msra.mxu0 0
    %1034 = vmatpush.bf16.msra.mxu0 %v1009
    %1035 = vmatpush.bf16.msra.mxu0 %v976
    %1036 = vmatpush.bf16.msra.mxu0 %v960
    %1037 = vmatpush.bf16.msra.mxu0 %v944
    %1038 = vmatpush.bf16.msra.mxu0 %v928
    %1039 = vmatmul.bf16.gmra.mxu0 %v1003
    %v1040 = vpop.f32.mrf.mxu0
    %v1041 = vadd.f32 %v989, %v1040
    %v1042 = vpop.f32.mrf.mxu0
    %v1043 = vadd.f32 %v994, %v1042
    %1044 = vdwg.mxu0
    %1045 = vmatpush.bf16.msra.mxu0 0
    %1046 = vmatpush.bf16.msra.mxu0 0
    %1047 = vmatpush.bf16.msra.mxu0 0
    %1048 = vmatpush.bf16.msra.mxu0 %v1012
    %1049 = vmatpush.bf16.msra.mxu0 %v980
    %1050 = vmatpush.bf16.msra.mxu0 %v964
    %1051 = vmatpush.bf16.msra.mxu0 %v948
    %1052 = vmatpush.bf16.msra.mxu0 %v932
    %1053 = vmatmul.bf16.gmra.mxu0 %v1003
    %v1054 = vpop.f32.mrf.mxu0
    %v1055 = vadd.f32 %v989, %v1054
    %v1056 = vpop.f32.mrf.mxu0
    %v1057 = vadd.f32 %v994, %v1056
    %1058 = vdwg.mxu0
    %1059 = vmatpush.bf16.msra.mxu0 0
    %1060 = vmatpush.bf16.msra.mxu0 0
    %1061 = vmatpush.bf16.msra.mxu0 0
    %1062 = vmatpush.bf16.msra.mxu0 %v1015
    %1063 = vmatpush.bf16.msra.mxu0 %v984
    %1064 = vmatpush.bf16.msra.mxu0 %v968
    %1065 = vmatpush.bf16.msra.mxu0 %v952
    %1066 = vmatpush.bf16.msra.mxu0 %v936
    %1067 = vmatmul.bf16.gmra.mxu0 %v1003
    %v1068 = vpop.f32.mrf.mxu0
    %v1069 = vadd.f32 %v989, %v1068
    %v1070 = vpop.f32.mrf.mxu0
    %v1071 = vadd.f32 %v994, %v1070
    %1072 = vdwg.mxu0
    %v1073 = vmax.f32 %v1027, 0.0
    %v1074 = vmax.f32 %v1041, 0.0
    %v1075 = vmax.f32 %v1055, 0.0
    %v1076 = vmax.f32 %v1069, 0.0
    %v1077 = vmax.f32 %v1029, 0.0
    %v1078 = vmax.f32 %v1043, 0.0
    %v1079 = vmax.f32 %v1057, 0.0
    %v1080 = vmax.f32 %v1071, 0.0
    %v1081 = vadd.f32 %v1073, %v1074
    %1082 = vadd.xlane.f32.xlu0 %v1081
    %v1083 = vpop.xlane.xlu0 %1082
    %v1084 = vadd.f32 %v1077, %v1078
    %1085 = vadd.xlane.f32.xlu0 %v1084
    %v1086 = vpop.xlane.xlu0 %1085
    %v1087 = vadd.f32 %v1075, %v1076
    %1088 = vadd.xlane.f32.xlu0 %v1087
    %v1089 = vpop.xlane.xlu0 %1088
    %v1090 = vadd.f32 %v1079, %v1080
    %1091 = vadd.xlane.f32.xlu0 %v1090
    %v1092 = vpop.xlane.xlu0 %1091
    %vm1093 = vcmask 7168
    %v1094 = vsel %vm1093, %v1083, %v1089
    %v1095 = vsel %vm1093, %v1086, %v1092
    %v1096 = vmul.f32 %v1094, 0.00390625
    %v1097 = vmul.f32 %v1095, 0.00390625
    %v1098 = vld [vmem:[%s6] sm:$0xff]
    %v1099 = vld [vmem:[%s6 + $0x8] sm:$0xff]
    %v1100 = vld [vmem:[%s7] sm:$0x1]
    %v1102 = vperm.slane %v1100, 0
    %1104 = vxpose.xlu0.b32.start [1/16] %v1096, 128
    %1105 = vxpose.xlu0.b32.cont [2/16] %v1097, 128
    %1106 = vxpose.xlu0.b32.cont [3/16] 0.0, 128
    %1107 = vxpose.xlu0.b32.cont [4/16] 0.0, 128
    %1108 = vxpose.xlu0.b32.cont [5/16] 0.0, 128
    %1109 = vxpose.xlu0.b32.cont [6/16] 0.0, 128
    %1110 = vxpose.xlu0.b32.cont [7/16] 0.0, 128
    %1111 = vxpose.xlu0.b32.cont [8/16] 0.0, 128
    %1112 = vxpose.xlu0.b32.cont [9/16] 0.0, 128
    %1113 = vxpose.xlu0.b32.cont [10/16] 0.0, 128
    %1114 = vxpose.xlu0.b32.cont [11/16] 0.0, 128
    %1115 = vxpose.xlu0.b32.cont [12/16] 0.0, 128
    %1116 = vxpose.xlu0.b32.cont [13/16] 0.0, 128
    %1117 = vxpose.xlu0.b32.cont [14/16] 0.0, 128
    %1118 = vxpose.xlu0.b32.cont [15/16] 0.0, 128
    %1119 = vxpose.xlu0.b32.end [16/16] 0.0, 128
    %v1120 = vpop.trf.xlu0
    %v1121 = vpop.trf.xlu0
    %v1122 = vpop.trf.xlu0
    %v1123 = vpop.trf.xlu0
    %v1124 = vpop.trf.xlu0
    %v1125 = vpop.trf.xlu0
    %v1126 = vpop.trf.xlu0
    %v1127 = vpop.trf.xlu0
    %v1128 = vpop.trf.xlu0
    %v1129 = vpop.trf.xlu0
    %v1130 = vpop.trf.xlu0
    %v1131 = vpop.trf.xlu0
    %v1132 = vpop.trf.xlu0
    %v1133 = vpop.trf.xlu0
    %v1134 = vpop.trf.xlu0
    %v1135 = vpop.trf.xlu0
    %vm1136 = vcmask 130048
    %v1138 = vsel %vm1136, %v1120, 0
    %1140 = vmatpush.msra.mxu0 0.0
    %1141 = vmatpush.msra.mxu0 0.0
    %1142 = vmatpush.msra.mxu0 0.0
    %1143 = vmatpush.msra.mxu0 0.0
    %1144 = vmatpush.msra.mxu0 0.0
    %1145 = vmatpush.msra.mxu0 0.0
    %1146 = vmatpush.msra.mxu0 0.0
    %1147 = vmatpush.msra.mxu0 0.0
    %1148 = vmatpush.msra.mxu0 0.0
    %1149 = vmatpush.msra.mxu0 0.0
    %1150 = vmatpush.msra.mxu0 0.0
    %1151 = vmatpush.msra.mxu0 0.0
    %1152 = vmatpush.msra.mxu0 0.0
    %1153 = vmatpush.msra.mxu0 0.0
    %1154 = vmatpush.msra.mxu0 %v1099
    %1155 = vmatpush.msra.mxu0 %v1098
    %1156 = vmatmul.f32.gmra.mxu0 %v1138
    %v1157 = vpop.f32.mrf.mxu0
    %v1158 = vadd.f32 %v1102, %v1157
    %1159 = vdwg.mxu0
    %vm1160 = vcmask 74752
    %1161 = vst.msk [vmem:[#allocation5] sm:$0x3] %vm1160, %v1158
    // Predicated region
    $region38: #{net_forward.1} parent=1 // pred_check
      _
    $region39: #{net_forward.1} parent=1 // pred_check_branch
      %1163 = sbr.rel (0) target = $region41
    $region40: #{net_forward.1} parent=1 // pred_region
      %1165 = vsyncadd [#allocation4], 0
      %s1167 = sshll.u32 [#allocation5], 4
      %s1168 = int_to_ptr.vmem [resolvable:$true] %s1167
      %s1169 = sshll.u32 %s8, 4
      %s1170 = int_to_ptr.hbm [resolvable:$true] %s1169
      %1172 = dma.vmem_to_hbm [thread:$0]  %s1168, 32, %s1170, [#allocation4]
    $region41: #{net_forward.1} parent=1 // pred_fallthru
      _
    // Predicated region
    $region42: #{net_forward.1} parent=1 // pred_check
      _
    $region43: #{net_forward.1} parent=1 // pred_check_branch
      %1174 = sbr.rel (0) target = $region45
    $region44: #{net_forward.1} parent=1 // pred_region
      %1176 = dma.done [#allocation4], 32
    $region45: #{net_forward.1} parent=1 // pred_fallthru
      _
    %1177 = vsyncpa [#allocation3], 1
    %1178 = vsyncpa [#allocation4], 1

</llo_original>
